<compile_context>
chip_gen: v7x
topology: tpu7x:2x2x1
jax: 0.10.0
libtpu: 0.0.40
codegen_flags: <defaults>
</compile_context>

<pallas_src>
import functools

import jax
import jax.numpy as jnp
from jax.experimental import pallas as pl
from jax.experimental.pallas import tpu as pltpu


def _mlp_kernel(x_ref, w1_ref, ln_ref, w2_ref, b2_ref, o_ref, *,
                activation: str, use_norm: bool, ln_eps: float,
                ln_apply_bf16: bool):
    # ln_ref rows: 0 = fc1 bias, 1 = LayerNorm gamma, 2 = LayerNorm beta (all f32).
    b1 = ln_ref[0:1, :]

    # fc1 on the MXU: narrow (bf16) operands, f32 accumulation.
    h = jnp.dot(x_ref[...], w1_ref[...],
                preferred_element_type=jnp.float32) + b1

    # activation (f32 VPU math)
    if activation == "ReLU":
        h = jnp.maximum(h, 0.0)
    elif activation == "SquaredReLU":
        h = jnp.maximum(h, 0.0)
        h = h * h
    else:
        raise ValueError(f"unsupported activation: {activation}")

    if use_norm:
        # LayerNorm statistics over the hidden (last) dim, always in f32.
        mean = jnp.mean(h, axis=-1, keepdims=True)
        centered = h - mean
        var = jnp.mean(centered * centered, axis=-1, keepdims=True)
        inv = jax.lax.rsqrt(var + ln_eps)
        gamma = ln_ref[1:2, :]
        beta = ln_ref[2:3, :]
        if ln_apply_bf16:
            # bf16 VALU (v6e/v7x): scale-shift + fc2 downcast in bf16, stats stay f32.
            cd = w2_ref.dtype
            hn = (centered * inv).astype(cd) * gamma.astype(cd) + beta.astype(cd)
        else:
            hn = (centered * inv * gamma + beta).astype(w2_ref.dtype)
    else:
        hn = h.astype(w2_ref.dtype)

    # dropout: eval-mode identity
    # TODO(synk): training-mode dropout (pltpu.prng_random_bits mask) not implemented.

    # fc2: narrow operands to the MXU, f32 accumulation.
    out = jnp.dot(hn, w2_ref[...], preferred_element_type=jnp.float32) + b2_ref[...]
    o_ref[...] = out.astype(o_ref.dtype)


def _round_up(x, m):
    return (x + m - 1) // m * m


def _cdiv(a, b):
    return -(-a // b)


def mlp_forward(x, w1, b1, gamma, beta, w2, b2, *,
                activation="SquaredReLU", use_norm=True, ln_eps=1e-5,
                compute_dtype=jnp.bfloat16, out_dtype=jnp.float32,
                batch_tile=256):
    """x: [B, D]; w1: [D, H]; b1/gamma/beta: [1, H]; w2: [H, C]; b2: [1, C]."""
    B, D = x.shape
    H = w1.shape[1]
    C = w2.shape[1]

    # --- wrapper-side layout plumbing (cheap XLA ops) ----------------------
    # 1) lane-dense output: pad C up to a multiple of 128 (zero columns), slice later.
    C_pad = _round_up(C, 128)
    if C_pad != C:
        w2 = jnp.pad(w2, ((0, 0), (0, C_pad - C)))
        b2 = jnp.pad(b2, ((0, 0), (0, C_pad - C)))

    # 2) batch tiling: pick TB to (a) keep the last tile mostly full instead of
    #    padding B up to a fixed multiple of batch_tile, and (b) give at least two
    #    grid steps for moderately sized batches so the "parallel" axis can shard
    #    across v7x's two TensorCores.
    n_tiles = max(1, _cdiv(B, batch_tile))
    if B >= 128:
        n_tiles = max(n_tiles, 2)
    TB = _round_up(_cdiv(B, n_tiles), 8)
    B_pad = _round_up(B, TB)
    grid = B_pad // TB
    if B_pad != B:
        x = jnp.pad(x, ((0, B_pad - B), (0, 0)))

    # 3) narrow operands to the MXU; biases / LN params stay f32, packed into (3, H).
    x = x.astype(compute_dtype)
    w1 = w1.astype(compute_dtype)
    w2 = w2.astype(compute_dtype)
    ln_params = jnp.concatenate(
        [b1.reshape(1, H), gamma.reshape(1, H), beta.reshape(1, H)],
        axis=0).astype(jnp.float32)
    b2 = b2.astype(jnp.float32)

    # 4) bf16 LN-apply only where the VPU has bf16 lanes (v6e / v7x); f32 on v5e/v4.
    try:
        kind = jax.devices()[0].device_kind.lower()
    except Exception:
        kind = ""
    ln_apply_bf16 = (jnp.dtype(compute_dtype) == jnp.dtype(jnp.bfloat16)
                     and "v5" not in kind and "v4" not in kind)

    # 5) explicit VMEM budget from the real working set (+headroom), under v7x's 64 MiB.
    isz = jnp.dtype(compute_dtype).itemsize
    osz = jnp.dtype(out_dtype).itemsize
    vmem_bytes = (2 * TB * D * isz            # x stream (double-buffered)
                  + D * H * isz               # w1 (single-buffered)
                  + 8 * H * 4                 # packed LN params (sublane-padded)
                  + H * C_pad * isz           # w2 (single-buffered)
                  + 8 * C_pad * 4             # b2
                  + 2 * TB * C_pad * osz      # output (double-buffered)
                  + 4 * TB * H * 4)           # f32 hidden temporaries headroom
    vmem_limit = min(max(int(vmem_bytes * 1.25) + (4 << 20), 16 << 20), 64 << 20)

    flops = 2 * B_pad * (D * H + H * C_pad) + 8 * B_pad * H
    bytes_accessed = (B_pad * D * isz + D * H * isz + H * C_pad * isz
                      + (3 * H + C_pad) * 4 + B_pad * C_pad * osz)

    kernel = functools.partial(_mlp_kernel, activation=activation,
                               use_norm=use_norm, ln_eps=ln_eps,
                               ln_apply_bf16=ln_apply_bf16)

    # Resident operands: constant index_map -> never re-fetched -> single buffer.
    resident = functools.partial(pl.BlockSpec, pipeline_mode=pl.Buffered(1))

    out = pl.pallas_call(
        kernel,
        out_shape=jax.ShapeDtypeStruct((B_pad, C_pad), out_dtype),
        grid=(grid,),
        in_specs=[
            pl.BlockSpec((TB, D), lambda i: (i, 0)),   # activation stream (pipelined)
            resident((D, H), lambda i: (0, 0)),        # w1
            resident((3, H), lambda i: (0, 0)),        # packed b1 / gamma / beta
            resident((H, C_pad), lambda i: (0, 0)),    # w2
            resident((1, C_pad), lambda i: (0, 0)),    # b2
        ],
        out_specs=pl.BlockSpec((TB, C_pad), lambda i: (i, 0)),
        compiler_params=pltpu.CompilerParams(
            dimension_semantics=("parallel",),
            vmem_limit_bytes=vmem_limit),
        cost_estimate=pl.CostEstimate(flops=flops,
                                      transcendentals=B_pad,
                                      bytes_accessed=bytes_accessed),
    )(x, w1, ln_params, w2, b2)

    return out[:B, :C]


def _xavier_uniform(key, fan_in, fan_out, dtype=jnp.float32):
    # Matches nn.init.xavier_uniform_ on a PyTorch Linear weight [out, in];
    # we return its transpose [in, out].
    limit = (6.0 / (fan_in + fan_out)) ** 0.5
    return jax.random.uniform(key, (fan_in, fan_out), dtype=dtype,
                              minval=-limit, maxval=limit)


if __name__ == "__main__":
    # Module config: in_dim=32, hidden_ratio=4 -> hidden_dim=128, out_dim=16,
    # dropout=0.1 (eval -> identity), norm='LayerNorm', activation='SquaredReLU'.
    B, IN_DIM, HIDDEN_RATIO, OUT_DIM = 8, 32, 4, 16
    HIDDEN_DIM = int(HIDDEN_RATIO * IN_DIM)
    LN_EPS = 1e-5

    key = jax.random.PRNGKey(0)
    kx, kw1, kw2 = jax.random.split(key, 3)

    x = jax.random.normal(kx, (B, IN_DIM), dtype=jnp.float32)

    # Deterministic parameter init mirroring _init_weights (xavier_uniform + zero bias,
    # LayerNorm weight=1 / bias=0).
    w1 = _xavier_uniform(kw1, IN_DIM, HIDDEN_DIM)          # [D, H]
    b1 = jnp.zeros((1, HIDDEN_DIM), jnp.float32)
    gamma = jnp.ones((1, HIDDEN_DIM), jnp.float32)
    beta = jnp.zeros((1, HIDDEN_DIM), jnp.float32)
    w2 = _xavier_uniform(kw2, HIDDEN_DIM, OUT_DIM)         # [H, C]
    b2 = jnp.zeros((1, OUT_DIM), jnp.float32)

    out = mlp_forward(x, w1, b1, gamma, beta, w2, b2,
                      activation="SquaredReLU", use_norm=True, ln_eps=LN_EPS)
    out = jax.block_until_ready(out)

    # Pure-JAX reference, matching the kernel's bf16-operand / f32-accumulate recipe.
    xb = x.astype(jnp.bfloat16).astype(jnp.float32)
    w1b = w1.astype(jnp.bfloat16).astype(jnp.float32)
    w2b = w2.astype(jnp.bfloat16).astype(jnp.float32)
    h_ref = xb @ w1b + b1
    h_ref = jnp.square(jnp.maximum(h_ref, 0.0))
    mu = h_ref.mean(-1, keepdims=True)
    var = ((h_ref - mu) ** 2).mean(-1, keepdims=True)
    h_ref = (h_ref - mu) / jnp.sqrt(var + LN_EPS) * gamma + beta
    hb = h_ref.astype(jnp.bfloat16).astype(jnp.float32)
    ref = hb @ w2b + b2

    assert out.shape == (B, OUT_DIM), out.shape
    assert jnp.allclose(out, ref, atol=1e-2, rtol=1e-2), "mismatch vs reference"
    print("KERNEL_OK")
</pallas_src>

<mosaic_0001>
module attributes {stable_mosaic.version = 11 : i64} {
  func.func @_mlp_kernel(%arg0: i32, %arg1: memref<8x32xbf16, #tpu.memory_space<vmem>>, %arg2: memref<32x128xbf16, #tpu.memory_space<vmem>>, %arg3: memref<3x128xf32, #tpu.memory_space<vmem>>, %arg4: memref<128x128xbf16, #tpu.memory_space<vmem>>, %arg5: memref<1x128xf32, #tpu.memory_space<vmem>>, %arg6: memref<8x128xf32, #tpu.memory_space<vmem>>) attributes {dimension_semantics = [#tpu.dimension_semantics<parallel>], iteration_bounds = array<i64: 1>, scalar_prefetch = 0 : i64, scratch_operands = 0 : i64, tpu.core_type = #tpu.core_type<tc>, window_params = [{transform_indices = @transform_0, window_bounds = array<i64: 8, 32>}, {pipeline_mode = #tpu.pipeline_mode<synchronous>, transform_indices = @transform_1, window_bounds = array<i64: 32, 128>}, {pipeline_mode = #tpu.pipeline_mode<synchronous>, transform_indices = @transform_2, window_bounds = array<i64: 3, 128>}, {pipeline_mode = #tpu.pipeline_mode<synchronous>, transform_indices = @transform_3, window_bounds = array<i64: 128, 128>}, {pipeline_mode = #tpu.pipeline_mode<synchronous>, transform_indices = @transform_4, window_bounds = array<i64: 1, 128>}, {transform_indices = @transform_5, window_bounds = array<i64: 8, 128>}]} {
    %c0 = arith.constant 0 : index
    %c0_0 = arith.constant 0 : index
    %0 = vector.load %arg3[%c0, %c0_0] : memref<3x128xf32, #tpu.memory_space<vmem>>, vector<1x128xf32>
    %c0_1 = arith.constant 0 : index
    %c0_2 = arith.constant 0 : index
    %1 = vector.load %arg1[%c0_1, %c0_2] : memref<8x32xbf16, #tpu.memory_space<vmem>>, vector<8x32xbf16>
    %c0_3 = arith.constant 0 : index
    %c0_4 = arith.constant 0 : index
    %2 = vector.load %arg2[%c0_3, %c0_4] : memref<32x128xbf16, #tpu.memory_space<vmem>>, vector<32x128xbf16>
    %cst = arith.constant dense<0.000000e+00> : vector<8x128xf32>
    %3 = tpu.matmul %1, %2, %cst {dimension_numbers = #tpu.dot_dimension_numbers<[1], [0], [0], [1], [0, 0, 1, 1], [], []>} : vector<8x32xbf16>, vector<32x128xbf16>, vector<8x128xf32> -> vector<8x128xf32>
    %4 = vector.broadcast %0 : vector<1x128xf32> to vector<8x128xf32>
    %5 = arith.addf %3, %4 : vector<8x128xf32>
    %cst_5 = arith.constant 0.000000e+00 : f32
    %6 = vector.broadcast %cst_5 : f32 to vector<8x128xf32>
    %7 = arith.maximumf %5, %6 : vector<8x128xf32>
    %8 = arith.mulf %7, %7 : vector<8x128xf32>
    %cst_6 = arith.constant dense<0.000000e+00> : vector<8xf32>
    %9 = vector.multi_reduction <add>, %8, %cst_6 [1] : vector<8x128xf32> to vector<8xf32>
    %10 = vector.shape_cast %9 : vector<8xf32> to vector<8x1xf32>
    %cst_7 = arith.constant 1.280000e+02 : f32
    %11 = vector.broadcast %cst_7 : f32 to vector<8x1xf32>
    %12 = arith.divf %10, %11 : vector<8x1xf32>
    %13 = vector.broadcast %12 : vector<8x1xf32> to vector<8x128xf32>
    %14 = arith.subf %8, %13 : vector<8x128xf32>
    %15 = arith.mulf %14, %14 : vector<8x128xf32>
    %cst_8 = arith.constant dense<0.000000e+00> : vector<8xf32>
    %16 = vector.multi_reduction <add>, %15, %cst_8 [1] : vector<8x128xf32> to vector<8xf32>
    %17 = vector.shape_cast %16 : vector<8xf32> to vector<8x1xf32>
    %cst_9 = arith.constant 1.280000e+02 : f32
    %18 = vector.broadcast %cst_9 : f32 to vector<8x1xf32>
    %19 = arith.divf %17, %18 : vector<8x1xf32>
    %cst_10 = arith.constant 9.99999974E-6 : f32
    %20 = vector.broadcast %cst_10 : f32 to vector<8x1xf32>
    %21 = arith.addf %19, %20 : vector<8x1xf32>
    %22 = math.rsqrt %21 : vector<8x1xf32>
    %c1 = arith.constant 1 : index
    %c0_11 = arith.constant 0 : index
    %23 = vector.load %arg3[%c1, %c0_11] : memref<3x128xf32, #tpu.memory_space<vmem>>, vector<1x128xf32>
    %c2 = arith.constant 2 : index
    %c0_12 = arith.constant 0 : index
    %24 = vector.load %arg3[%c2, %c0_12] : memref<3x128xf32, #tpu.memory_space<vmem>>, vector<1x128xf32>
    %25 = vector.broadcast %22 : vector<8x1xf32> to vector<8x128xf32>
    %26 = arith.mulf %14, %25 : vector<8x128xf32>
    %27 = arith.truncf %26 : vector<8x128xf32> to vector<8x128xbf16>
    %28 = arith.truncf %23 : vector<1x128xf32> to vector<1x128xbf16>
    %29 = vector.broadcast %28 : vector<1x128xbf16> to vector<8x128xbf16>
    %30 = arith.mulf %27, %29 : vector<8x128xbf16>
    %31 = arith.truncf %24 : vector<1x128xf32> to vector<1x128xbf16>
    %32 = vector.broadcast %31 : vector<1x128xbf16> to vector<8x128xbf16>
    %33 = arith.addf %30, %32 : vector<8x128xbf16>
    %c0_13 = arith.constant 0 : index
    %c0_14 = arith.constant 0 : index
    %34 = vector.load %arg4[%c0_13, %c0_14] : memref<128x128xbf16, #tpu.memory_space<vmem>>, vector<128x128xbf16>
    %cst_15 = arith.constant dense<0.000000e+00> : vector<8x128xf32>
    %35 = tpu.matmul %33, %34, %cst_15 {dimension_numbers = #tpu.dot_dimension_numbers<[1], [0], [0], [1], [0, 0, 1, 1], [], []>} : vector<8x128xbf16>, vector<128x128xbf16>, vector<8x128xf32> -> vector<8x128xf32>
    %c0_16 = arith.constant 0 : index
    %c0_17 = arith.constant 0 : index
    %36 = vector.load %arg5[%c0_16, %c0_17] : memref<1x128xf32, #tpu.memory_space<vmem>>, vector<1x128xf32>
    %37 = vector.broadcast %36 : vector<1x128xf32> to vector<8x128xf32>
    %38 = arith.addf %35, %37 : vector<8x128xf32>
    %c0_18 = arith.constant 0 : index
    %c0_19 = arith.constant 0 : index
    %39 = vector.load %arg6[%c0_18, %c0_19] : memref<8x128xf32, #tpu.memory_space<vmem>>, vector<8x128xf32>
    tpu.vector_store %arg6[%c0_18, %c0_19], %38 {strides = array<i32>} : memref<8x128xf32, #tpu.memory_space<vmem>>, vector<8x128xf32>,
    return
  }
  func.func @transform_0(%arg0: i32) -> (i32, i32) {
    %c0_i32 = arith.constant 0 : i32
    %c0_i32_0 = arith.constant 0 : i32
    return %arg0, %c0_i32 : i32, i32
  }
  func.func @transform_1(%arg0: i32) -> (i32, i32) {
    %c0_i32 = arith.constant 0 : i32
    %c0_i32_0 = arith.constant 0 : i32
    %c0_i32_1 = arith.constant 0 : i32
    return %c0_i32, %c0_i32_0 : i32, i32
  }
  func.func @transform_2(%arg0: i32) -> (i32, i32) {
    %c0_i32 = arith.constant 0 : i32
    %c0_i32_0 = arith.constant 0 : i32
    %c0_i32_1 = arith.constant 0 : i32
    return %c0_i32, %c0_i32_0 : i32, i32
  }
  func.func @transform_3(%arg0: i32) -> (i32, i32) {
    %c0_i32 = arith.constant 0 : i32
    %c0_i32_0 = arith.constant 0 : i32
    %c0_i32_1 = arith.constant 0 : i32
    return %c0_i32, %c0_i32_0 : i32, i32
  }
  func.func @transform_4(%arg0: i32) -> (i32, i32) {
    %c0_i32 = arith.constant 0 : i32
    %c0_i32_0 = arith.constant 0 : i32
    %c0_i32_1 = arith.constant 0 : i32
    return %c0_i32, %c0_i32_0 : i32, i32
  }
  func.func @transform_5(%arg0: i32) -> (i32, i32) {
    %c0_i32 = arith.constant 0 : i32
    %c0_i32_0 = arith.constant 0 : i32
    return %arg0, %c0_i32 : i32, i32
  }
}

</mosaic_0001>

<llo_original>
// kernel: tpu_custom_call.1
$region0: #{tpu_custom_call.1}
  #allocation0 [shape = 'u32[]', space=smem, size = 0x4, offset = 0x4, fixed_abs, tag = 'smem constant byte address 0x4 - core index']
  #allocation1 [shape = 'u32[144,128]{1,0:T(1,128)}', space=vmem, size = 0x12000, scoped, tag = 'internal scratch']
  %s0 = inlined_call_operand.hbm [shape: bf16[8,32], index: 0, kind: input, shape index: {}]
  %s1 = inlined_call_operand.hbm [shape: bf16[32,128], index: 1, kind: input, shape index: {}]
  %s2 = inlined_call_operand.vmem [shape: f32[3,128], index: 2, kind: input, shape index: {}]
  %s3 = inlined_call_operand.hbm [shape: bf16[128,128], index: 3, kind: input, shape index: {}]
  %s4 = inlined_call_operand.vmem [shape: f32[1,128], index: 4, kind: input, shape index: {}]
  %s5 = inlined_call_operand.hbm [shape: f32[8,128], index: 5, kind: output, shape index: {}]
  %s6 = sld [smem:[#allocation0]]
  $region42: #{tpu_custom_call.1} parent=0
    _
  %s8 = ssub.s32 1, %s6
  %s9 = scalar_select 0, %s8, %s6
  $region1: #{tpu_custom_call.1} parent=0
    #allocation2 [shape = 'u8[2048]{0}', space=vmem, size = 0x800, scoped, tag = 'input window, operand 0, single buffered']
    #allocation3 [shape = 's32[1]{0}', space=sflag, size = 0x4, scoped, tag = 'scoped memory for tpu_custom_call.1']
    #allocation4 [shape = 's32[1]{0}', space=sflag, size = 0x4, scoped, tag = 'scoped memory for tpu_custom_call.1']
    #allocation5 [shape = 'u8[8192]{0}', space=vmem, size = 0x2000, scoped, tag = 'input window, operand 1, single buffered']
    #allocation6 [shape = 's32[1]{0}', space=sflag, size = 0x4, scoped, tag = 'scoped memory for tpu_custom_call.1']
    #allocation7 [shape = 'u8[32768]{0}', space=vmem, size = 0x8000, scoped, tag = 'input window, operand 3, single buffered']
    #allocation8 [shape = 'u8[4096]{0}', space=vmem, size = 0x1000, scoped, tag = 'output window, operand 0, single buffered']
    %10 = vsyncpa [#allocation3], 0
    %11 = vsyncpa [#allocation6], 0
    %12 = vsyncpa [#allocation4], 0
    // Predicated region
    $region2: #{tpu_custom_call.1} parent=1 // pred_check
      _
    $region3: #{tpu_custom_call.1} parent=1 // pred_check_branch
      %14 = sbr.rel (0) target = $region5
    $region4: #{tpu_custom_call.1} parent=1 // pred_region
      %s16 = ssub.s32 64, 64
      %17 = vsyncadd [#allocation3], %s16
      %s19 = sshll.u32 [#allocation2], 4
      %s20 = int_to_ptr.vmem [resolvable:$true] %s19
      %22 = dma.hbm_to_vmem [thread:$0]  %s0, 64, %s20, [#allocation3]
    $region5: #{tpu_custom_call.1} parent=1 // pred_fallthru
      _
    // Predicated region
    $region6: #{tpu_custom_call.1} parent=1 // pred_check
      _
    $region7: #{tpu_custom_call.1} parent=1 // pred_check_branch
      %24 = sbr.rel (0) target = $region9
    $region8: #{tpu_custom_call.1} parent=1 // pred_region
      %s26 = ssub.s32 256, 256
      %27 = vsyncadd [#allocation6], %s26
      %s28 = sshll.u32 [#allocation5], 4
      %s29 = int_to_ptr.vmem [resolvable:$true] %s28
      %34 = dma.hbm_to_vmem [thread:$0]  %s1, 256, %s29, [#allocation6], 64, 64, 4
    $region9: #{tpu_custom_call.1} parent=1 // pred_fallthru
      _
    // Predicated region
    $region10: #{tpu_custom_call.1} parent=1 // pred_check
      _
    $region11: #{tpu_custom_call.1} parent=1 // pred_check_branch
      %36 = sbr.rel (0) target = $region13
    $region12: #{tpu_custom_call.1} parent=1 // pred_region
      _
    $region13: #{tpu_custom_call.1} parent=1 // pred_fallthru
      _
    // Predicated region
    $region14: #{tpu_custom_call.1} parent=1 // pred_check
      _
    $region15: #{tpu_custom_call.1} parent=1 // pred_check_branch
      %38 = sbr.rel (0) target = $region17
    $region16: #{tpu_custom_call.1} parent=1 // pred_region
      %s40 = ssub.s32 1024, 1024
      %41 = vsyncadd [#allocation6], %s40
      %s42 = sshll.u32 [#allocation7], 4
      %s43 = int_to_ptr.vmem [resolvable:$true] %s42
      %48 = dma.hbm_to_vmem [thread:$0]  %s3, 1024, %s43, [#allocation6], 64, 64, 4
    $region17: #{tpu_custom_call.1} parent=1 // pred_fallthru
      _
    // Predicated region
    $region18: #{tpu_custom_call.1} parent=1 // pred_check
      _
    $region19: #{tpu_custom_call.1} parent=1 // pred_check_branch
      %50 = sbr.rel (0) target = $region21
    $region20: #{tpu_custom_call.1} parent=1 // pred_region
      _
    $region21: #{tpu_custom_call.1} parent=1 // pred_fallthru
      _
    // Predicated region
    $region22: #{tpu_custom_call.1} parent=1 // pred_check
      _
    $region23: #{tpu_custom_call.1} parent=1 // pred_check_branch
      %52 = sbr.rel (0) target = $region25
    $region24: #{tpu_custom_call.1} parent=1 // pred_region
      %53 = dma.done [#allocation3], 64
    $region25: #{tpu_custom_call.1} parent=1 // pred_fallthru
      _
    // Predicated region
    $region26: #{tpu_custom_call.1} parent=1 // pred_check
      _
    $region27: #{tpu_custom_call.1} parent=1 // pred_check_branch
      %55 = sbr.rel (0) target = $region29
    $region28: #{tpu_custom_call.1} parent=1 // pred_region
      %56 = dma.done [#allocation6], 256
    $region29: #{tpu_custom_call.1} parent=1 // pred_fallthru
      _
    // Predicated region
    $region30: #{tpu_custom_call.1} parent=1 // pred_check
      _
    $region31: #{tpu_custom_call.1} parent=1 // pred_check_branch
      %58 = sbr.rel (0) target = $region33
    $region32: #{tpu_custom_call.1} parent=1 // pred_region
      %59 = dma.done [#allocation6], 1024
    $region33: #{tpu_custom_call.1} parent=1 // pred_fallthru
      _
    %v61 = vld [vmem:[%s2] sm:$0x1]
    %v62 = vld [vmem:[#allocation2] sm:$0xf]
    %v63 = vld [vmem:[#allocation5] sm:$0xf]
    %v64 = vld [vmem:[#allocation5 + $0x4] sm:$0xf]
    %v65 = vld [vmem:[#allocation5 + $0x8] sm:$0xf]
    %v66 = vld [vmem:[#allocation5 + $0xc] sm:$0xf]
    %v67 = vlaneseq
    %v68 = vshrl.u32 %v67, 7
    %v69 = vsub.s32 0, %v68
    %v70 = vrot.slane %v61, %v69
    %v75 = vunpack.c.l.b16 %v63
    %v76 = vunpack.c.l.b16 %v64
    %v77 = vunpack.c.l.b16 %v65
    %v78 = vunpack.c.l.b16 %v66
    %v79 = vpack.c.b16 %v76, %v75
    %v80 = vpack.c.b16 %v78, %v77
    %vm83 = vcmask 261120
    %v85 = vsel %vm83, %v62, 0
    %87 = vmatprep.subr.bf16.mxu0 0
    %88 = vmatpush1.bf16.msra.mxu0 %v79
    %89 = vmatprep.subr.bf16.mxu0 0
    %90 = vmatpush1.bf16.msra.mxu0 %v80
    %91 = vmatprep.subr.bf16.mxu0 0
    %92 = vmatpush1.bf16.msra.mxu0 0
    %93 = vmatprep.subr.bf16.mxu0 0
    %94 = vmatpush1.bf16.msra.mxu0 0
    %95 = vmatprep.subr.bf16.mxu0 0
    %96 = vmatpush1.bf16.msra.mxu0 0
    %97 = vmatprep.subr.bf16.mxu0 0
    %98 = vmatpush1.bf16.msra.mxu0 0
    %99 = vmatprep.subr.bf16.mxu0 0
    %100 = vmatpush1.bf16.msra.mxu0 0
    %101 = vmatprep.subr.bf16.mxu0 0
    %102 = vmatpush1.bf16.msra.mxu0 0
    %103 = vmatprep.subr.bf16.mxu0 0
    %104 = vmatpush1.bf16.msra.mxu0 0
    %105 = vmatprep.subr.bf16.mxu0 0
    %106 = vmatpush1.bf16.msra.mxu0 0
    %107 = vmatprep.subr.bf16.mxu0 0
    %108 = vmatpush1.bf16.msra.mxu0 0
    %109 = vmatprep.subr.bf16.mxu0 0
    %110 = vmatpush1.bf16.msra.mxu0 0
    %111 = vmatprep.subr.bf16.mxu0 0
    %112 = vmatpush1.bf16.msra.mxu0 0
    %113 = vmatprep.subr.bf16.mxu0 0
    %114 = vmatpush1.bf16.msra.mxu0 0
    %115 = vmatprep.subr.bf16.mxu0 0
    %116 = vmatpush1.bf16.msra.mxu0 0
    %117 = vmatprep.subr.bf16.mxu0 0
    %118 = vmatpush1.bf16.msra.mxu0 0
    %119 = vmatprep.mubr.bf16.mxu0 0
    %120 = vmatmul.mubr.bf16.gmra.mrb[0].mxu0 %v85
    %v121 = vpop.f32.mrb[0].mxu0
    %v122 = vadd.f32 %v70, %v121
    %v123 = vpop.f32.mrb[0].mxu0
    %v124 = vpop.f32.mrb[0].mxu0
    %v125 = vpop.f32.mrb[0].mxu0
    %126 = vdwg.mxu0
    %v127 = vmax.f32 %v122, 0.0
    %v128 = vmul.f32 %v127, %v127
    %129 = vadd.xlane.f32.xlu0 %v128
    %v130 = vpop.xlane.xlu0 %129
    %v131 = vrcp.pop 128.0
    %v132 = vmul.f32 %v130, %v131
    %v133 = vsub.f32 %v128, %v132
    %v134 = vmul.f32 %v133, %v133
    %135 = vadd.xlane.f32.xlu0 %v134
    %v136 = vpop.xlane.xlu0 %135
    %v137 = vmul.f32 %v136, %v131
    %v138 = vadd.f32 %v137, 1e-05
    %v139 = vrsqrt.pop %v138
    %v140 = vld [vmem:[%s2 + $0x1] sm:$0x1]
    %v141 = vld [vmem:[%s2 + $0x2] sm:$0x1]
    %v142 = vmul.f32 %v133, %v139
    %v143 = vpack.c.bf16 %v142, %v142
    %v144 = vpack.c.bf16 %v140, %v140
    %v146 = vpack.i.b16 %v144, %v144
    %v148 = vlaneseq
    %v149 = vshrl.u32 %v148, 7
    %v150 = vsub.s32 0, %v149
    %v151 = vrot.slane %v146, %v150
    %v152 = vmul.bf16 %v143, %v151
    %v153 = vpack.c.bf16 %v141, %v141
    %v155 = vpack.i.b16 %v153, %v153
    %v157 = vlaneseq
    %v158 = vshrl.u32 %v157, 7
    %v159 = vsub.s32 0, %v158
    %v160 = vrot.slane %v155, %v159
    %v161 = vadd.bf16 %v152, %v160
    %v162 = vld [vmem:[#allocation7] sm:$0xf]
    %v163 = vld [vmem:[#allocation7 + $0x4] sm:$0xf]
    %v164 = vld [vmem:[#allocation7 + $0x8] sm:$0xf]
    %v165 = vld [vmem:[#allocation7 + $0xc] sm:$0xf]
    %v166 = vld [vmem:[#allocation7 + $0x10] sm:$0xf]
    %v167 = vld [vmem:[#allocation7 + $0x14] sm:$0xf]
    %v168 = vld [vmem:[#allocation7 + $0x18] sm:$0xf]
    %v169 = vld [vmem:[#allocation7 + $0x1c] sm:$0xf]
    %v170 = vld [vmem:[#allocation7 + $0x20] sm:$0xf]
    %v171 = vld [vmem:[#allocation7 + $0x24] sm:$0xf]
    %v172 = vld [vmem:[#allocation7 + $0x28] sm:$0xf]
    %v173 = vld [vmem:[#allocation7 + $0x2c] sm:$0xf]
    %v174 = vld [vmem:[#allocation7 + $0x30] sm:$0xf]
    %v175 = vld [vmem:[#allocation7 + $0x34] sm:$0xf]
    %v176 = vld [vmem:[#allocation7 + $0x38] sm:$0xf]
    %v177 = vld [vmem:[#allocation7 + $0x3c] sm:$0xf]
    %v178 = vld [vmem:[%s4] sm:$0x1]
    %v180 = vlaneseq
    %v181 = vshrl.u32 %v180, 7
    %v182 = vsub.s32 0, %v181
    %v183 = vrot.slane %v178, %v182
    %v201 = vunpack.c.l.b16 %v162
    %v202 = vunpack.c.l.b16 %v163
    %v203 = vunpack.c.l.b16 %v164
    %v204 = vunpack.c.l.b16 %v165
    %v205 = vunpack.c.l.b16 %v166
    %v206 = vunpack.c.l.b16 %v167
    %v207 = vunpack.c.l.b16 %v168
    %v208 = vunpack.c.l.b16 %v169
    %v209 = vunpack.c.l.b16 %v170
    %v210 = vunpack.c.l.b16 %v171
    %v211 = vunpack.c.l.b16 %v172
    %v212 = vunpack.c.l.b16 %v173
    %v213 = vunpack.c.l.b16 %v174
    %v214 = vunpack.c.l.b16 %v175
    %v215 = vunpack.c.l.b16 %v176
    %v216 = vunpack.c.l.b16 %v177
    %v217 = vpack.c.b16 %v202, %v201
    %v218 = vpack.c.b16 %v204, %v203
    %v219 = vpack.c.b16 %v206, %v205
    %v220 = vpack.c.b16 %v208, %v207
    %v221 = vpack.c.b16 %v210, %v209
    %v222 = vpack.c.b16 %v212, %v211
    %v223 = vpack.c.b16 %v214, %v213
    %v224 = vpack.c.b16 %v216, %v215
    %233 = vmatprep.subr.bf16.mxu0 0
    %234 = vmatpush1.bf16.msra.mxu0 %v217
    %235 = vmatprep.subr.bf16.mxu0 0
    %236 = vmatpush1.bf16.msra.mxu0 %v218
    %237 = vmatprep.subr.bf16.mxu0 0
    %238 = vmatpush1.bf16.msra.mxu0 %v219
    %239 = vmatprep.subr.bf16.mxu0 0
    %240 = vmatpush1.bf16.msra.mxu0 %v220
    %241 = vmatprep.subr.bf16.mxu0 0
    %242 = vmatpush1.bf16.msra.mxu0 %v221
    %243 = vmatprep.subr.bf16.mxu0 0
    %244 = vmatpush1.bf16.msra.mxu0 %v222
    %245 = vmatprep.subr.bf16.mxu0 0
    %246 = vmatpush1.bf16.msra.mxu0 %v223
    %247 = vmatprep.subr.bf16.mxu0 0
    %248 = vmatpush1.bf16.msra.mxu0 %v224
    %249 = vmatprep.subr.bf16.mxu0 0
    %250 = vmatpush1.bf16.msra.mxu0 0
    %251 = vmatprep.subr.bf16.mxu0 0
    %252 = vmatpush1.bf16.msra.mxu0 0
    %253 = vmatprep.subr.bf16.mxu0 0
    %254 = vmatpush1.bf16.msra.mxu0 0
    %255 = vmatprep.subr.bf16.mxu0 0
    %256 = vmatpush1.bf16.msra.mxu0 0
    %257 = vmatprep.subr.bf16.mxu0 0
    %258 = vmatpush1.bf16.msra.mxu0 0
    %259 = vmatprep.subr.bf16.mxu0 0
    %260 = vmatpush1.bf16.msra.mxu0 0
    %261 = vmatprep.subr.bf16.mxu0 0
    %262 = vmatpush1.bf16.msra.mxu0 0
    %263 = vmatprep.subr.bf16.mxu0 0
    %264 = vmatpush1.bf16.msra.mxu0 0
    %265 = vmatprep.mubr.bf16.mxu0 0
    %266 = vmatmul.mubr.bf16.gmra.mrb[0].mxu0 %v161
    %v267 = vpop.f32.mrb[0].mxu0
    %v268 = vadd.f32 %v183, %v267
    %v269 = vpop.f32.mrb[0].mxu0
    %v270 = vpop.f32.mrb[0].mxu0
    %v271 = vpop.f32.mrb[0].mxu0
    %272 = vdwg.mxu0
    %273 = vst [vmem:[#allocation8] sm:$0xff] %v268
    // Predicated region
    $region34: #{tpu_custom_call.1} parent=1 // pred_check
      _
    $region35: #{tpu_custom_call.1} parent=1 // pred_check_branch
      %275 = sbr.rel (0) target = $region37
    $region36: #{tpu_custom_call.1} parent=1 // pred_region
      %s277 = ssub.s32 128, 128
      %278 = vsyncadd [#allocation4], %s277
      %s280 = sshll.u32 [#allocation8], 4
      %s281 = int_to_ptr.vmem [resolvable:$true] %s280
      %283 = dma.vmem_to_hbm [thread:$0]  %s281, 128, %s5, [#allocation4]
    $region37: #{tpu_custom_call.1} parent=1 // pred_fallthru
      _
    // Predicated region
    $region38: #{tpu_custom_call.1} parent=1 // pred_check
      _
    $region39: #{tpu_custom_call.1} parent=1 // pred_check_branch
      %285 = sbr.rel (0) target = $region41
    $region40: #{tpu_custom_call.1} parent=1 // pred_region
      %286 = dma.done [#allocation4], 128
    $region41: #{tpu_custom_call.1} parent=1 // pred_fallthru
      _
    %287 = vsyncpa [#allocation3], 1
    %288 = vsyncpa [#allocation6], 1
    %289 = vsyncpa [#allocation4], 1

</llo_original>
